<compile_context>
chip_gen: v6e
topology: v6e:2x2x1
jax: 0.10.0
libtpu: 0.0.40
codegen_flags: <defaults>
</compile_context>

<pallas_src>
import functools

import jax
import jax.numpy as jnp
from jax import lax
from jax.experimental import pallas as pl
from jax.experimental.pallas import tpu as pltpu


def _conv_bn_block_kernel(*refs, activation, K, P, T, Bb, compute_dtype, has_mask):
    if has_mask:
        scale_ref, shift_ref, w_ref, bias_ref, x_ref, mask_ref, out_ref = refs
    else:
        scale_ref, shift_ref, w_ref, bias_ref, x_ref, out_ref = refs
        mask_ref = None

    scale = scale_ref[...]        # (C_in, 1)  f32
    shift = shift_ref[...]        # (C_in, 1)  f32
    bias = bias_ref[...]          # (C_out, 1) f32
    w = w_ref[...]                # (K, C_out, C_in) compute_dtype
    C_in = scale.shape[0]
    C_out = bias.shape[0]

    def process(b):
        # Folded BatchNorm1d (eval mode): o = x * scale + shift.
        o = x_ref[b] * scale + shift                       # (C_in, T) f32

        # Activation (VPU / EUP).
        if activation == "relu":
            o = jnp.maximum(o, 0.0)
        elif activation == "tanh":
            o = jnp.tanh(o)
        # else: identity

        # Dropout(p=0.5) is identity at inference time.
        # TODO(synk): training-mode stochastic dropout (Bernoulli mask) not implemented.

        # Sequence mask: 0/1 array -> plain multiply (1 VALU op, not compare+select).
        if has_mask:
            o = o * mask_ref[b]                            # (1, T) broadcast

        # Zero "same"-padding halo built in VMEM (cast to compute dtype *before* padding).
        o = o.astype(compute_dtype)
        if P > 0:
            zpad = jnp.zeros((C_in, P), compute_dtype)
            o = jnp.concatenate([zpad, o, zpad], axis=1)   # (C_in, T + 2P)

        # K unrolled accumulating MXU dots -- only one shifted operand view live at a time.
        acc = jnp.zeros((C_out, T), jnp.float32)
        for k in range(K):
            acc = acc + jnp.dot(w[k], o[:, k:k + T],
                                preferred_element_type=jnp.float32)

        out_ref[b] = (acc + bias).astype(out_ref.dtype)

    if Bb <= 8:
        for b in range(Bb):        # small static unroll
            process(b)
    else:
        def body(b, carry):
            process(b)
            return carry
        lax.fori_loop(0, Bb, body, 0)


def conv_bn_block(x, mask, params, *, kernel_size, activation=None, eps=1e-5,
                  compute_dtype=jnp.float32):
    """x: (B, C_in, T) f32, mask: (B, T) or None. Returns (B, C_out, T) f32."""
    B, C_in, T = x.shape
    C_out, C_in_w, K = params["conv_w"].shape
    assert C_in_w == C_in and K == kernel_size
    assert (K - 1) % 2 == 0
    # The torch module builds BatchNorm1d(out_channels) but applies it to the
    # input (C_in channels) -> forward only runs when C_in == C_out.
    assert C_in == C_out
    P = (K - 1) // 2

    # ---- Fold BN (eval mode, running stats) into per-channel scale / shift. ----
    scale_v = params["bn_gamma"].astype(jnp.float32) * lax.rsqrt(
        params["bn_var"].astype(jnp.float32) + eps)
    shift_v = params["bn_beta"].astype(jnp.float32) - (
        params["bn_mean"].astype(jnp.float32) * scale_v)
    scale = scale_v.reshape(C_in, 1)
    shift = shift_v.reshape(C_in, 1)

    # Weight as (K, C_out, C_in) so the kernel takes one (C_out, C_in) tap at a time.
    w = jnp.transpose(params["conv_w"], (2, 0, 1)).astype(compute_dtype)
    bias = params["conv_b"].reshape(C_out, 1).astype(jnp.float32)

    has_mask = mask is not None

    # ---- Batch-tile sizing: bytes-based and VMEM-aware (no fixed lane_target). ----
    # Double-buffered x / out / mask blocks per batch element, f32.
    per_elem = (2 * C_in + 2 * C_out + 2) * T * 4
    vmem_block_budget = 24 * 1024 * 1024
    Bb = max(1, min(B, vmem_block_budget // max(per_elem, 1)))
    if B >= 2:
        Bb = min(Bb, -(-B // 2))      # >= 2 grid steps: v7x megacore + DMA/compute overlap
    num_blocks = -(-B // Bb)          # Pallas handles a partial last block (OOB rows dropped)
    # TODO(synk): for B == 1 with very long T (single element exceeding the VMEM budget),
    # additionally tile T with a P-lane halo.

    block_bytes = Bb * per_elem
    vmem_limit = int(min(40 * 1024 * 1024, max(32 * 1024 * 1024, 2 * block_bytes)))

    kernel = functools.partial(
        _conv_bn_block_kernel, activation=activation, K=K, P=P, T=T, Bb=Bb,
        compute_dtype=compute_dtype, has_mask=has_mask)

    in_specs = [
        pl.BlockSpec((C_in, 1), lambda b: (0, 0)),            # BN scale
        pl.BlockSpec((C_in, 1), lambda b: (0, 0)),            # BN shift
        pl.BlockSpec((K, C_out, C_in), lambda b: (0, 0, 0)),  # conv weight (tap-major)
        pl.BlockSpec((C_out, 1), lambda b: (0, 0)),           # conv bias
        pl.BlockSpec((Bb, C_in, T), lambda b: (b, 0, 0)),     # x batch tile (native layout)
    ]
    args = [scale, shift, w, bias, x.astype(jnp.float32)]
    if has_mask:
        in_specs.append(pl.BlockSpec((Bb, 1, T), lambda b: (b, 0, 0)))
        args.append(mask.astype(jnp.float32).reshape(B, 1, T))

    out = pl.pallas_call(
        kernel,
        out_shape=jax.ShapeDtypeStruct((B, C_out, T), jnp.float32),
        grid_spec=pltpu.PrefetchScalarGridSpec(
            num_scalar_prefetch=0,
            grid=(num_blocks,),
            in_specs=in_specs,
            out_specs=pl.BlockSpec((Bb, C_out, T), lambda b: (b, 0, 0)),
        ),
        compiler_params=pltpu.CompilerParams(
            dimension_semantics=("parallel",),
            vmem_limit_bytes=vmem_limit),
    )(*args)
    return out


def conv_bn_block_reference(x, mask, params, *, kernel_size, activation=None, eps=1e-5):
    """Pure-JAX reference mirroring the torch forward (eval mode)."""
    P = (kernel_size - 1) // 2
    gamma = params["bn_gamma"][None, :, None]
    beta = params["bn_beta"][None, :, None]
    mean = params["bn_mean"][None, :, None]
    var = params["bn_var"][None, :, None]
    o = (x - mean) * lax.rsqrt(var + eps) * gamma + beta
    if activation == "relu":
        o = jnp.maximum(o, 0.0)
    elif activation == "tanh":
        o = jnp.tanh(o)
    if mask is not None:
        o = jnp.where(mask[:, None, :] > 0, o, 0.0)
    out = lax.conv_general_dilated(
        o, params["conv_w"], window_strides=(1,), padding=[(P, P)],
        dimension_numbers=("NCH", "OIH", "NCH"))
    return out + params["conv_b"][None, :, None]


if __name__ == "__main__":
    B, C, T, K = 2, 8, 32, 5           # in_channels == out_channels == 8
    activation = "relu"

    key = jax.random.PRNGKey(0)
    ks = jax.random.split(key, 8)
    params = {
        "conv_w": 0.1 * jax.random.normal(ks[0], (C, C, K), jnp.float32),
        "conv_b": 0.1 * jax.random.normal(ks[1], (C,), jnp.float32),
        "bn_gamma": 1.0 + 0.1 * jax.random.normal(ks[2], (C,), jnp.float32),
        "bn_beta": 0.1 * jax.random.normal(ks[3], (C,), jnp.float32),
        "bn_mean": 0.1 * jax.random.normal(ks[4], (C,), jnp.float32),
        "bn_var": 1.0 + 0.1 * jax.random.uniform(ks[5], (C,), jnp.float32),
    }
    x = jax.random.normal(ks[6], (B, C, T), jnp.float32)
    # mask: last quarter of each sequence masked out
    mask = (jnp.arange(T)[None, :] < (T - T // 4)).astype(jnp.float32)
    mask = jnp.broadcast_to(mask, (B, T))

    out = conv_bn_block(x, mask, params, kernel_size=K, activation=activation)
    out = jax.block_until_ready(out)

    ref = conv_bn_block_reference(x, mask, params, kernel_size=K,
                                  activation=activation)
    ref = jax.block_until_ready(ref)

    assert out.shape == (B, C, T)
    assert jnp.allclose(out, ref, atol=1e-5, rtol=1e-5), (
        f"max abs diff {float(jnp.max(jnp.abs(out - ref)))}")
    print("KERNEL_OK")
</pallas_src>

<mosaic_0001>
module attributes {stable_mosaic.version = 11 : i64} {
  func.func @_conv_bn_block_kernel(%arg0: i32, %arg1: memref<8x1xf32, #tpu.memory_space<vmem>>, %arg2: memref<8x1xf32, #tpu.memory_space<vmem>>, %arg3: memref<5x8x8xf32, #tpu.memory_space<vmem>>, %arg4: memref<8x1xf32, #tpu.memory_space<vmem>>, %arg5: memref<1x8x32xf32, #tpu.memory_space<vmem>>, %arg6: memref<1x1x32xf32, #tpu.memory_space<vmem>>, %arg7: memref<1x8x32xf32, #tpu.memory_space<vmem>>) attributes {dimension_semantics = [#tpu.dimension_semantics<parallel>], iteration_bounds = array<i64: 2>, scalar_prefetch = 0 : i64, scratch_operands = 0 : i64, tpu.core_type = #tpu.core_type<tc>, window_params = [{pipeline_mode = #tpu.pipeline_mode<synchronous>, transform_indices = @transform_0, window_bounds = array<i64: 8, 1>}, {pipeline_mode = #tpu.pipeline_mode<synchronous>, transform_indices = @transform_1, window_bounds = array<i64: 8, 1>}, {pipeline_mode = #tpu.pipeline_mode<synchronous>, transform_indices = @transform_2, window_bounds = array<i64: 5, 8, 8>}, {pipeline_mode = #tpu.pipeline_mode<synchronous>, transform_indices = @transform_3, window_bounds = array<i64: 8, 1>}, {transform_indices = @transform_4, window_bounds = array<i64: 1, 8, 32>}, {transform_indices = @transform_5, window_bounds = array<i64: 1, 1, 32>}, {transform_indices = @transform_6, window_bounds = array<i64: 1, 8, 32>}]} {
    %c0 = arith.constant 0 : index
    %c0_0 = arith.constant 0 : index
    %0 = vector.load %arg1[%c0, %c0_0] : memref<8x1xf32, #tpu.memory_space<vmem>>, vector<8x1xf32>
    %c0_1 = arith.constant 0 : index
    %c0_2 = arith.constant 0 : index
    %1 = vector.load %arg2[%c0_1, %c0_2] : memref<8x1xf32, #tpu.memory_space<vmem>>, vector<8x1xf32>
    %c0_3 = arith.constant 0 : index
    %c0_4 = arith.constant 0 : index
    %2 = vector.load %arg4[%c0_3, %c0_4] : memref<8x1xf32, #tpu.memory_space<vmem>>, vector<8x1xf32>
    %c0_5 = arith.constant 0 : index
    %c0_6 = arith.constant 0 : index
    %c0_7 = arith.constant 0 : index
    %3 = vector.load %arg3[%c0_5, %c0_6, %c0_7] : memref<5x8x8xf32, #tpu.memory_space<vmem>>, vector<5x8x8xf32>
    %c0_8 = arith.constant 0 : index
    %c0_9 = arith.constant 0 : index
    %c0_10 = arith.constant 0 : index
    %4 = vector.load %arg5[%c0_8, %c0_9, %c0_10] : memref<1x8x32xf32, #tpu.memory_space<vmem>>, vector<1x8x32xf32>
    %5 = vector.shape_cast %4 : vector<1x8x32xf32> to vector<8x32xf32>
    %6 = vector.broadcast %0 : vector<8x1xf32> to vector<8x32xf32>
    %7 = arith.mulf %5, %6 : vector<8x32xf32>
    %8 = vector.broadcast %1 : vector<8x1xf32> to vector<8x32xf32>
    %9 = arith.addf %7, %8 : vector<8x32xf32>
    %cst = arith.constant 0.000000e+00 : f32
    %10 = vector.broadcast %cst : f32 to vector<8x32xf32>
    %11 = arith.maximumf %9, %10 : vector<8x32xf32>
    %c0_11 = arith.constant 0 : index
    %c0_12 = arith.constant 0 : index
    %c0_13 = arith.constant 0 : index
    %12 = vector.load %arg6[%c0_11, %c0_12, %c0_13] : memref<1x1x32xf32, #tpu.memory_space<vmem>>, vector<1x1x32xf32>
    %13 = vector.shape_cast %12 : vector<1x1x32xf32> to vector<1x32xf32>
    %14 = vector.broadcast %13 : vector<1x32xf32> to vector<8x32xf32>
    %15 = arith.mulf %11, %14 : vector<8x32xf32>
    %cst_14 = arith.constant 0.000000e+00 : f32
    %16 = vector.broadcast %cst_14 : f32 to vector<8x2xf32>
    %17 = tpu.concatenate %16, %15, %16 in 1 : vector<8x2xf32>, vector<8x32xf32>, vector<8x2xf32> -> vector<8x36xf32>
    %cst_15 = arith.constant 0.000000e+00 : f32
    %18 = vector.broadcast %cst_15 : f32 to vector<8x32xf32>
    %19 = vector.extract_strided_slice %3 {offsets = [0, 0, 0], sizes = [1, 8, 8], strides = [1, 1, 1]} : vector<5x8x8xf32> to vector<1x8x8xf32>
    %20 = vector.shape_cast %19 : vector<1x8x8xf32> to vector<8x8xf32>
    %21 = vector.extract_strided_slice %17 {offsets = [0, 0], sizes = [8, 32], strides = [1, 1]} : vector<8x36xf32> to vector<8x32xf32>
    %cst_16 = arith.constant dense<0.000000e+00> : vector<8x32xf32>
    %22 = tpu.matmul %20, %21, %cst_16 {dimension_numbers = #tpu.dot_dimension_numbers<[1], [0], [0], [1], [0, 0, 1, 1], [], []>} : vector<8x8xf32>, vector<8x32xf32>, vector<8x32xf32> -> vector<8x32xf32>
    %23 = arith.addf %18, %22 : vector<8x32xf32>
    %24 = vector.extract_strided_slice %3 {offsets = [1, 0, 0], sizes = [1, 8, 8], strides = [1, 1, 1]} : vector<5x8x8xf32> to vector<1x8x8xf32>
    %25 = vector.shape_cast %24 : vector<1x8x8xf32> to vector<8x8xf32>
    %26 = vector.extract_strided_slice %17 {offsets = [0, 1], sizes = [8, 32], strides = [1, 1]} : vector<8x36xf32> to vector<8x32xf32>
    %cst_17 = arith.constant dense<0.000000e+00> : vector<8x32xf32>
    %27 = tpu.matmul %25, %26, %cst_17 {dimension_numbers = #tpu.dot_dimension_numbers<[1], [0], [0], [1], [0, 0, 1, 1], [], []>} : vector<8x8xf32>, vector<8x32xf32>, vector<8x32xf32> -> vector<8x32xf32>
    %28 = arith.addf %23, %27 : vector<8x32xf32>
    %29 = vector.extract_strided_slice %3 {offsets = [2, 0, 0], sizes = [1, 8, 8], strides = [1, 1, 1]} : vector<5x8x8xf32> to vector<1x8x8xf32>
    %30 = vector.shape_cast %29 : vector<1x8x8xf32> to vector<8x8xf32>
    %31 = vector.extract_strided_slice %17 {offsets = [0, 2], sizes = [8, 32], strides = [1, 1]} : vector<8x36xf32> to vector<8x32xf32>
    %cst_18 = arith.constant dense<0.000000e+00> : vector<8x32xf32>
    %32 = tpu.matmul %30, %31, %cst_18 {dimension_numbers = #tpu.dot_dimension_numbers<[1], [0], [0], [1], [0, 0, 1, 1], [], []>} : vector<8x8xf32>, vector<8x32xf32>, vector<8x32xf32> -> vector<8x32xf32>
    %33 = arith.addf %28, %32 : vector<8x32xf32>
    %34 = vector.extract_strided_slice %3 {offsets = [3, 0, 0], sizes = [1, 8, 8], strides = [1, 1, 1]} : vector<5x8x8xf32> to vector<1x8x8xf32>
    %35 = vector.shape_cast %34 : vector<1x8x8xf32> to vector<8x8xf32>
    %36 = vector.extract_strided_slice %17 {offsets = [0, 3], sizes = [8, 32], strides = [1, 1]} : vector<8x36xf32> to vector<8x32xf32>
    %cst_19 = arith.constant dense<0.000000e+00> : vector<8x32xf32>
    %37 = tpu.matmul %35, %36, %cst_19 {dimension_numbers = #tpu.dot_dimension_numbers<[1], [0], [0], [1], [0, 0, 1, 1], [], []>} : vector<8x8xf32>, vector<8x32xf32>, vector<8x32xf32> -> vector<8x32xf32>
    %38 = arith.addf %33, %37 : vector<8x32xf32>
    %39 = vector.extract_strided_slice %3 {offsets = [4, 0, 0], sizes = [1, 8, 8], strides = [1, 1, 1]} : vector<5x8x8xf32> to vector<1x8x8xf32>
    %40 = vector.shape_cast %39 : vector<1x8x8xf32> to vector<8x8xf32>
    %41 = vector.extract_strided_slice %17 {offsets = [0, 4], sizes = [8, 32], strides = [1, 1]} : vector<8x36xf32> to vector<8x32xf32>
    %cst_20 = arith.constant dense<0.000000e+00> : vector<8x32xf32>
    %42 = tpu.matmul %40, %41, %cst_20 {dimension_numbers = #tpu.dot_dimension_numbers<[1], [0], [0], [1], [0, 0, 1, 1], [], []>} : vector<8x8xf32>, vector<8x32xf32>, vector<8x32xf32> -> vector<8x32xf32>
    %43 = arith.addf %38, %42 : vector<8x32xf32>
    %44 = vector.broadcast %2 : vector<8x1xf32> to vector<8x32xf32>
    %45 = arith.addf %43, %44 : vector<8x32xf32>
    %c0_21 = arith.constant 0 : index
    %c0_22 = arith.constant 0 : index
    %c0_23 = arith.constant 0 : index
    %46 = vector.load %arg7[%c0_21, %c0_22, %c0_23] : memref<1x8x32xf32, #tpu.memory_space<vmem>>, vector<1x8x32xf32>
    %47 = vector.shape_cast %46 : vector<1x8x32xf32> to vector<8x32xf32>
    %48 = vector.shape_cast %45 : vector<8x32xf32> to vector<1x8x32xf32>
    tpu.vector_store %arg7[%c0_21, %c0_22, %c0_23], %48 {strides = array<i32>} : memref<1x8x32xf32, #tpu.memory_space<vmem>>, vector<1x8x32xf32>,
    return
  }
  func.func @transform_0(%arg0: i32) -> (i32, i32) {
    %c0_i32 = arith.constant 0 : i32
    %c0_i32_0 = arith.constant 0 : i32
    %c0_i32_1 = arith.constant 0 : i32
    return %c0_i32, %c0_i32_0 : i32, i32
  }
  func.func @transform_1(%arg0: i32) -> (i32, i32) {
    %c0_i32 = arith.constant 0 : i32
    %c0_i32_0 = arith.constant 0 : i32
    %c0_i32_1 = arith.constant 0 : i32
    return %c0_i32, %c0_i32_0 : i32, i32
  }
  func.func @transform_2(%arg0: i32) -> (i32, i32, i32) {
    %c0_i32 = arith.constant 0 : i32
    %c0_i32_0 = arith.constant 0 : i32
    %c0_i32_1 = arith.constant 0 : i32
    %c0_i32_2 = arith.constant 0 : i32
    return %c0_i32, %c0_i32_0, %c0_i32_1 : i32, i32, i32
  }
  func.func @transform_3(%arg0: i32) -> (i32, i32) {
    %c0_i32 = arith.constant 0 : i32
    %c0_i32_0 = arith.constant 0 : i32
    %c0_i32_1 = arith.constant 0 : i32
    return %c0_i32, %c0_i32_0 : i32, i32
  }
  func.func @transform_4(%arg0: i32) -> (i32, i32, i32) {
    %c0_i32 = arith.constant 0 : i32
    %c0_i32_0 = arith.constant 0 : i32
    %c0_i32_1 = arith.constant 0 : i32
    return %arg0, %c0_i32, %c0_i32_0 : i32, i32, i32
  }
  func.func @transform_5(%arg0: i32) -> (i32, i32, i32) {
    %c0_i32 = arith.constant 0 : i32
    %c0_i32_0 = arith.constant 0 : i32
    %c0_i32_1 = arith.constant 0 : i32
    return %arg0, %c0_i32, %c0_i32_0 : i32, i32, i32
  }
  func.func @transform_6(%arg0: i32) -> (i32, i32, i32) {
    %c0_i32 = arith.constant 0 : i32
    %c0_i32_0 = arith.constant 0 : i32
    %c0_i32_1 = arith.constant 0 : i32
    return %arg0, %c0_i32, %c0_i32_0 : i32, i32, i32
  }
}

</mosaic_0001>

<llo_original>
// kernel: tpu_custom_call.1
$region0: #{tpu_custom_call.1}
  #allocation0 [shape = 'u32[]', space=smem, size = 0x4, offset = 0x4, fixed_abs, tag = 'smem constant byte address 0x4 - core index']
  #allocation1 [shape = 'u32[144,128]{1,0:T(1,128)}', space=vmem, size = 0x12000, scoped, tag = 'internal scratch']
  %s0 = inlined_call_operand.vmem [shape: f32[8,1], index: 0, kind: input, shape index: {}]
  %s1 = inlined_call_operand.vmem [shape: f32[8,1], index: 1, kind: input, shape index: {}]
  %s2 = inlined_call_operand.hbm [shape: f32[5,8,8], index: 2, kind: input, shape index: {}]
  %s3 = inlined_call_operand.vmem [shape: f32[8,1], index: 3, kind: input, shape index: {}]
  %s4 = inlined_call_operand.vmem [shape: f32[2,8,32], index: 4, kind: input, shape index: {}]
  %s5 = inlined_call_operand.vmem [shape: f32[2,1,32], index: 5, kind: input, shape index: {}]
  %s6 = inlined_call_operand.hbm [shape: f32[2,8,32], index: 6, kind: output, shape index: {}]
  %s7 = sld [smem:[#allocation0]]
  $region61: #{tpu_custom_call.1} parent=0
    _
  %s9 = ssub.s32 1, %s7
  %s10 = scalar_select 0, %s9, %s7
  $region1: #{tpu_custom_call.1} parent=0
    #allocation2 [shape = 'u8[20480]{0}', space=vmem, size = 0x5000, scoped, tag = 'input window, operand 2, single buffered']
    #allocation3 [shape = 's32[2]{0}', space=sflag, size = 0x8, scoped, tag = 'scoped memory for tpu_custom_call.1']
    #allocation4 [shape = 's32[2]{0}', space=sflag, size = 0x8, scoped, tag = 'scoped memory for tpu_custom_call.1']
    #allocation5 [shape = 'u8[8192]{0}', space=vmem, size = 0x2000, scoped, tag = 'output window, operand 0']
    %11 = vsyncpa [#allocation3], 0
    %12 = vsyncpa [#allocation4], 0
    %s13 = scalar_lea.sflag [#allocation4], 1
    %14 = vsyncpa %s13, 0
    loop: start=0, step=1, limit=4
    $region2: #{tpu_custom_call.1} parent=1 // loop_pre_header
      _
    $region3: #{tpu_custom_call.1} parent=1 // loop_header
      %s16 = sphi 0, %s20
      %p17 = scmp.ge.s32.totalorder %s16, 4
      %s24 = sphi 0, %s24
      %s26 = sphi 0, %s24
      %s27 = sphi 0, %s26
      %s41 = sphi 0, %s27
      %s45 = sphi 0, %s45
      %s47 = sphi 0, %s45
      %s48 = sphi 0, %s47
      %s62 = sphi 0, %s48
      %s66 = sphi 0, %s66
      %s68 = sphi 0, %s66
      %s69 = sphi 0, %s68
      %s83 = sphi 0, %s69
      %s87 = sphi 0, %s87
      %s89 = sphi 0, %s87
      %s90 = sphi 0, %s89
      %s104 = sphi 0, %s90
      %s110 = sphi 0, %s112
      %s113 = sphi 0, %s110
      %s114 = sphi 0, %s113
      %s130 = sphi 0, %s114
      %s136 = sphi 0, %s138
      %s139 = sphi 0, %s136
      %s140 = sphi 0, %s139
      %s156 = sphi 0, %s140
      %s162 = sphi 0, %s164
      %s165 = sphi 0, %s162
      %s166 = sphi 0, %s165
      %s182 = sphi 0, %s166
    $region4: #{tpu_custom_call.1} parent=1 // loop_header_branch
      %19 = sbr.rel (%p17) target = $region8
    $region5: #{tpu_custom_call.1} parent=1 // loop_body
      %s21 = ssub.s32 %s16, 1
      %s22 = ssub.s32 %s16, 2
      %s23 = sadd.s32 %s16, 1
      %s25 = sadd.s32 %s24, 1
      %p28 = scmp.eq.s32.totalorder %s16, 1
      %p29 = scmp.ne.s32.totalorder %s24, %s26
      %p30 = scmp.eq.s32.totalorder %s16, 0
      %p31 = por %p29, %p30
      %p32 = scmp.ne.s32.totalorder %s24, %s26
      %p33 = scmp.eq.s32.totalorder %s21, 1
      %p34 = por %p32, %p33
      %p35 = scmp.ne.s32.totalorder %s26, %s27
      %p36 = scmp.eq.s32.totalorder %s21, 0
      %p37 = por %p35, %p36
      %p38 = scmp.ne.s32.totalorder %s26, %s27
      %p39 = scmp.eq.s32.totalorder %s22, 1
      %p40 = por %p38, %p39
      %p42 = scmp.ne.s32.totalorder %s27, %s41
      %p43 = scmp.eq.s32.totalorder %s22, 0
      %p44 = por %p42, %p43
      %s46 = sadd.s32 %s45, 1
      %p49 = scmp.eq.s32.totalorder %s16, 1
      %p50 = scmp.ne.s32.totalorder %s45, %s47
      %p51 = scmp.eq.s32.totalorder %s16, 0
      %p52 = por %p50, %p51
      %p53 = scmp.ne.s32.totalorder %s45, %s47
      %p54 = scmp.eq.s32.totalorder %s21, 1
      %p55 = por %p53, %p54
      %p56 = scmp.ne.s32.totalorder %s47, %s48
      %p57 = scmp.eq.s32.totalorder %s21, 0
      %p58 = por %p56, %p57
      %p59 = scmp.ne.s32.totalorder %s47, %s48
      %p60 = scmp.eq.s32.totalorder %s22, 1
      %p61 = por %p59, %p60
      %p63 = scmp.ne.s32.totalorder %s48, %s62
      %p64 = scmp.eq.s32.totalorder %s22, 0
      %p65 = por %p63, %p64
      %s67 = sadd.s32 %s66, 1
      %p70 = scmp.eq.s32.totalorder %s16, 1
      %p71 = scmp.ne.s32.totalorder %s66, %s68
      %p72 = scmp.eq.s32.totalorder %s16, 0
      %p73 = por %p71, %p72
      %p74 = scmp.ne.s32.totalorder %s66, %s68
      %p75 = scmp.eq.s32.totalorder %s21, 1
      %p76 = por %p74, %p75
      %p77 = scmp.ne.s32.totalorder %s68, %s69
      %p78 = scmp.eq.s32.totalorder %s21, 0
      %p79 = por %p77, %p78
      %p80 = scmp.ne.s32.totalorder %s68, %s69
      %p81 = scmp.eq.s32.totalorder %s22, 1
      %p82 = por %p80, %p81
      %p84 = scmp.ne.s32.totalorder %s69, %s83
      %p85 = scmp.eq.s32.totalorder %s22, 0
      %p86 = por %p84, %p85
      %s88 = sadd.s32 %s87, 1
      %p91 = scmp.eq.s32.totalorder %s16, 1
      %p92 = scmp.ne.s32.totalorder %s87, %s89
      %p93 = scmp.eq.s32.totalorder %s16, 0
      %p94 = por %p92, %p93
      %p95 = scmp.ne.s32.totalorder %s87, %s89
      %p96 = scmp.eq.s32.totalorder %s21, 1
      %p97 = por %p95, %p96
      %p98 = scmp.ne.s32.totalorder %s89, %s90
      %p99 = scmp.eq.s32.totalorder %s21, 0
      %p100 = por %p98, %p99
      %p101 = scmp.ne.s32.totalorder %s89, %s90
      %p102 = scmp.eq.s32.totalorder %s22, 1
      %p103 = por %p101, %p102
      %p105 = scmp.ne.s32.totalorder %s90, %s104
      %p106 = scmp.eq.s32.totalorder %s22, 0
      %p107 = por %p105, %p106
      %s108 = ssub.s32 %s16, %s23
      %p109 = scmp.eq.s32.totalorder %s108, 0
      %s111 = sadd.s32 %s110, 1
      %s112 = scalar_select %p109, %s110, %s111
      %p115 = pneg %p109
      %p116 = scmp.eq.s32.totalorder %s16, 1
      %p117 = por %p115, %p116
      %p118 = scmp.ne.s32.totalorder %s110, %s113
      %p119 = scmp.eq.s32.totalorder %s16, 0
      %p120 = por %p118, %p119
      %p121 = scmp.ne.s32.totalorder %s110, %s113
      %p122 = scmp.eq.s32.totalorder %s21, 1
      %p123 = por %p121, %p122
      %p124 = scmp.ne.s32.totalorder %s113, %s114
      %p125 = scmp.eq.s32.totalorder %s21, 0
      %p126 = por %p124, %p125
      %p127 = scmp.ne.s32.totalorder %s113, %s114
      %p128 = scmp.eq.s32.totalorder %s22, 1
      %p129 = por %p127, %p128
      %p131 = scmp.ne.s32.totalorder %s114, %s130
      %p132 = scmp.eq.s32.totalorder %s22, 0
      %p133 = por %p131, %p132
      %s134 = ssub.s32 %s16, %s23
      %p135 = scmp.eq.s32.totalorder %s134, 0
      %s137 = sadd.s32 %s136, 1
      %s138 = scalar_select %p135, %s136, %s137
      %p141 = pneg %p135
      %p142 = scmp.eq.s32.totalorder %s16, 1
      %p143 = por %p141, %p142
      %p144 = scmp.ne.s32.totalorder %s136, %s139
      %p145 = scmp.eq.s32.totalorder %s16, 0
      %p146 = por %p144, %p145
      %p147 = scmp.ne.s32.totalorder %s136, %s139
      %p148 = scmp.eq.s32.totalorder %s21, 1
      %p149 = por %p147, %p148
      %p150 = scmp.ne.s32.totalorder %s139, %s140
      %p151 = scmp.eq.s32.totalorder %s21, 0
      %p152 = por %p150, %p151
      %p153 = scmp.ne.s32.totalorder %s139, %s140
      %p154 = scmp.eq.s32.totalorder %s22, 1
      %p155 = por %p153, %p154
      %p157 = scmp.ne.s32.totalorder %s140, %s156
      %p158 = scmp.eq.s32.totalorder %s22, 0
      %p159 = por %p157, %p158
      %s160 = ssub.s32 %s16, %s23
      %p161 = scmp.eq.s32.totalorder %s160, 0
      %s163 = sadd.s32 %s162, 1
      %s164 = scalar_select %p161, %s162, %s163
      %p167 = pneg %p161
      %p168 = scmp.eq.s32.totalorder %s16, 1
      %p169 = por %p167, %p168
      %p170 = scmp.ne.s32.totalorder %s162, %s165
      %p171 = scmp.eq.s32.totalorder %s16, 0
      %p172 = por %p170, %p171
      %p173 = scmp.ne.s32.totalorder %s162, %s165
      %p174 = scmp.eq.s32.totalorder %s21, 1
      %p175 = por %p173, %p174
      %p176 = scmp.ne.s32.totalorder %s165, %s166
      %p177 = scmp.eq.s32.totalorder %s21, 0
      %p178 = por %p176, %p177
      %p179 = scmp.ne.s32.totalorder %s165, %s166
      %p180 = scmp.eq.s32.totalorder %s22, 1
      %p181 = por %p179, %p180
      %p183 = scmp.ne.s32.totalorder %s166, %s182
      %p184 = scmp.eq.s32.totalorder %s22, 0
      %p185 = por %p183, %p184
      %p186 = scmp.le.s32.totalorder 1, %s16
      %p187 = scmp.lt.s32.totalorder %s16, 3
      %p188 = pnand %p186, %p187
      %p189 = pneg %p188
      // Predicated region
      $region9: #{tpu_custom_call.1} parent=5 // pred_check
        _
      $region10: #{tpu_custom_call.1} parent=5 // pred_check_branch
        %191 = sbr.rel (%p188) target = $region12
      $region11: #{tpu_custom_call.1} parent=5 // pred_region
        %s192 = ssub.s32 %s16, 1
        // Predicated region
        $region13: #{tpu_custom_call.1} parent=11 // pred_check
          %p193 = pneg %p37
        $region14: #{tpu_custom_call.1} parent=11 // pred_check_branch
          %195 = sbr.rel (%p193) target = $region16
        $region15: #{tpu_custom_call.1} parent=11 // pred_region
          _
        $region16: #{tpu_custom_call.1} parent=11 // pred_fallthru
          _
        // Predicated region
        $region17: #{tpu_custom_call.1} parent=11 // pred_check
          %p196 = pneg %p58
        $region18: #{tpu_custom_call.1} parent=11 // pred_check_branch
          %198 = sbr.rel (%p196) target = $region20
        $region19: #{tpu_custom_call.1} parent=11 // pred_region
          _
        $region20: #{tpu_custom_call.1} parent=11 // pred_fallthru
          _
        // Predicated region
        $region21: #{tpu_custom_call.1} parent=11 // pred_check
          %p199 = pneg %p79
        $region22: #{tpu_custom_call.1} parent=11 // pred_check_branch
          %201 = sbr.rel (%p199) target = $region24
        $region23: #{tpu_custom_call.1} parent=11 // pred_region
          %s203 = ssub.s32 640, 640
          %204 = vsyncadd [#allocation3], %s203
          %s205 = sshll.u32 [#allocation2], 4
          %s206 = int_to_ptr.vmem [resolvable:$true] %s205
          %211 = dma.hbm_to_vmem [thread:$0]  %s2, 640, %s206, [#allocation3], 128, 128, 8
        $region24: #{tpu_custom_call.1} parent=11 // pred_fallthru
          _
        // Predicated region
        $region25: #{tpu_custom_call.1} parent=11 // pred_check
          %p212 = pneg %p100
        $region26: #{tpu_custom_call.1} parent=11 // pred_check_branch
          %214 = sbr.rel (%p212) target = $region28
        $region27: #{tpu_custom_call.1} parent=11 // pred_region
          _
        $region28: #{tpu_custom_call.1} parent=11 // pred_fallthru
          _
      $region12: #{tpu_custom_call.1} parent=5 // pred_fallthru
        _
      %p215 = scmp.lt.s32.totalorder %s16, 2
      // Predicated region
      $region29: #{tpu_custom_call.1} parent=5 // pred_check
        %p216 = pneg %p215
      $region30: #{tpu_custom_call.1} parent=5 // pred_check_branch
        %218 = sbr.rel (%p216) target = $region32
      $region31: #{tpu_custom_call.1} parent=5 // pred_region
        // Predicated region
        $region33: #{tpu_custom_call.1} parent=31 // pred_check
          %p219 = pneg %p120
        $region34: #{tpu_custom_call.1} parent=31 // pred_check_branch
          %221 = sbr.rel (%p219) target = $region36
        $region35: #{tpu_custom_call.1} parent=31 // pred_region
          %p222 = scmp.lt.s32.totalorder %s16, 1
          %s223 = scalar_select %p222, %s16, 1
          %s224 = smul.addr %s223, 8
          %s225 = scalar_lea.vmem %s4, %s224
        $region36: #{tpu_custom_call.1} parent=31 // pred_fallthru
          _
        // Predicated region
        $region37: #{tpu_custom_call.1} parent=31 // pred_check
          %p226 = pneg %p146
        $region38: #{tpu_custom_call.1} parent=31 // pred_check_branch
          %228 = sbr.rel (%p226) target = $region40
        $region39: #{tpu_custom_call.1} parent=31 // pred_region
          %p229 = scmp.lt.s32.totalorder %s16, 1
          %s230 = scalar_select %p229, %s16, 1
          %s231 = scalar_lea.vmem %s5, %s230
        $region40: #{tpu_custom_call.1} parent=31 // pred_fallthru
          _
      $region32: #{tpu_custom_call.1} parent=5 // pred_fallthru
        _
      %p232 = scmp.le.s32.totalorder 1, %s16
      %p233 = scmp.lt.s32.totalorder %s16, 3
      %p234 = pnand %p232, %p233
      %p235 = pneg %p234
      // Predicated region
      $region41: #{tpu_custom_call.1} parent=5 // pred_check
        _
      $region42: #{tpu_custom_call.1} parent=5 // pred_check_branch
        %237 = sbr.rel (%p234) target = $region44
      $region43: #{tpu_custom_call.1} parent=5 // pred_region
        %s238 = ssub.s32 %s16, 1
        // Predicated region
        $region45: #{tpu_custom_call.1} parent=43 // pred_check
          %p239 = pneg %p79
        $region46: #{tpu_custom_call.1} parent=43 // pred_check_branch
          %241 = sbr.rel (%p239) target = $region48
        $region47: #{tpu_custom_call.1} parent=43 // pred_region
          %242 = dma.done [#allocation3], 640
        $region48: #{tpu_custom_call.1} parent=43 // pred_fallthru
          _
        %p243 = pneg %p37
        %p244 = pneg %p34
        %p245 = pneg %p58
        %p246 = pneg %p55
        %p247 = pneg %p79
        %p248 = pneg %p76
        %p249 = pneg %p100
        %p250 = pneg %p97
        %p251 = scmp.lt.s32.totalorder %s21, 1
        %s252 = scalar_select %p251, %s21, 1
        %s253 = smul.addr %s252, 8
        %s254 = scalar_lea.vmem %s4, %s253
        %p255 = pneg %p126
        %p256 = pneg %p123
        %p257 = scmp.lt.s32.totalorder %s21, 1
        %s258 = scalar_select %p257, %s21, 1
        %s259 = scalar_lea.vmem %s5, %s258
        %p260 = pneg %p152
        %p261 = pneg %p149
        %p262 = pneg %p178
        %p263 = pneg %p175
        %s264 = sand.u32 %s165, 1
        %s265 = scalar_lea.sflag [#allocation4], %s264
        %s266 = sand.u32 %s165, 1
        %s267 = smul.addr %s266, 8
        %s268 = scalar_lea.vmem [#allocation5], %s267
        %p269 = scmp.lt.s32.totalorder %s21, 1
        %s270 = scalar_select %p269, %s21, 1
        %s271 = smul.addr %s270, 8
        %s272 = scalar_lea.vmem %s4, %s271
        %p273 = scmp.lt.s32.totalorder %s21, 1
        %s274 = scalar_select %p273, %s21, 1
        %s275 = scalar_lea.vmem %s5, %s274
        %v276 = vld [vmem:[%s0] sm:$0xff]
        %v277 = vld [vmem:[%s1] sm:$0xff]
        %v278 = vld [vmem:[%s3] sm:$0xff]
        %v279 = vld [vmem:[#allocation2] sm:$0xff]
        %v280 = vld [vmem:[#allocation2 + $0x8] sm:$0xff]
        %v281 = vld [vmem:[#allocation2 + $0x10] sm:$0xff]
        %v282 = vld [vmem:[#allocation2 + $0x18] sm:$0xff]
        %v283 = vld [vmem:[#allocation2 + $0x20] sm:$0xff]
        %v284 = vld [vmem:[%s272] sm:$0xff]
        %286 = vset.pattern.permute.xlu0 0
        %287 = vperm.xlu0 %286, %v276
        %v288 = vpop.permute.xlu0 %287
        %v290 = vmul.f32 %v284, %v288
        %292 = vset.pattern.permute.xlu0 0
        %293 = vperm.xlu0 %292, %v277
        %v294 = vpop.permute.xlu0 %293
        %v296 = vadd.f32 %v290, %v294
        %v297 = vmax.f32 %v296, 0.0
        %v298 = vld [vmem:[%s275] sm:$0x1]
        %v300 = vlaneseq
        %v301 = vshrl.u32 %v300, 7
        %v302 = vsub.s32 0, %v301
        %v303 = vrot.slane %v298, %v302
        %v305 = vmul.f32 %v297, %v303
        %307 = vrot.lane.b32.xlu0 %v305, 2
        %v308 = vpop.permute.xlu0 %307
        %vm310 = vcmask 15360
        %v311 = vsel %vm310, 0.0, %v308
        %vm312 = vcmask 277504
        %v313 = vsel %vm312, %v311, 0.0
        %315 = vrot.lane.b32.xlu0 %v313, 127
        %v316 = vpop.permute.xlu0 %315
        %vm318 = vcmask 64512
        %v320 = vsel %vm318, %v280, 0
        %322 = vmatprep.subr.mxu0 0.0
        %323 = vmatpush1.msra.mxu0 0.0
        %324 = vmatprep.subr.mxu0 0.0
        %325 = vmatpush1.msra.mxu0 0.0
        %326 = vmatprep.subr.mxu0 0.0
        %327 = vmatpush1.msra.mxu0 0.0
        %328 = vmatprep.subr.mxu0 0.0
        %329 = vmatpush1.msra.mxu0 0.0
        %330 = vmatprep.subr.mxu0 0.0
        %331 = vmatpush1.msra.mxu0 0.0
        %332 = vmatprep.subr.mxu0 0.0
        %333 = vmatpush1.msra.mxu0 0.0
        %334 = vmatprep.subr.mxu0 0.0
        %335 = vmatpush1.msra.mxu0 0.0
        %336 = vmatprep.subr.mxu0 0.0
        %337 = vmatpush1.msra.mxu0 0.0
        %338 = vmatprep.subr.mxu0 0.0
        %339 = vmatpush1.msra.mxu0 0.0
        %340 = vmatprep.subr.mxu0 0.0
        %341 = vmatpush1.msra.mxu0 0.0
        %342 = vmatprep.subr.mxu0 0.0
        %343 = vmatpush1.msra.mxu0 0.0
        %344 = vmatprep.subr.mxu0 0.0
        %345 = vmatpush1.msra.mxu0 0.0
        %346 = vmatprep.subr.mxu0 0.0
        %347 = vmatpush1.msra.mxu0 0.0
        %348 = vmatprep.subr.mxu0 0.0
        %349 = vmatpush1.msra.mxu0 0.0
        %350 = vmatprep.subr.mxu0 0.0
        %351 = vmatpush1.msra.mxu0 0.0
        %352 = vmatprep.subr.mxu0 0.0
        %353 = vmatpush1.msra.mxu0 %v316
        %354 = vmatprep.subr.mxu0 0.0
        %355 = vmatpush2.msra.mxu0 0.0
        %356 = vmatprep.subr.mxu0 0.0
        %357 = vmatpush2.msra.mxu0 0.0
        %358 = vmatprep.subr.mxu0 0.0
        %359 = vmatpush2.msra.mxu0 0.0
        %360 = vmatprep.subr.mxu0 0.0
        %361 = vmatpush2.msra.mxu0 0.0
        %362 = vmatprep.subr.mxu0 0.0
        %363 = vmatpush2.msra.mxu0 0.0
        %364 = vmatprep.subr.mxu0 0.0
        %365 = vmatpush2.msra.mxu0 0.0
        %366 = vmatprep.subr.mxu0 0.0
        %367 = vmatpush2.msra.mxu0 0.0
        %368 = vmatprep.subr.mxu0 0.0
        %369 = vmatpush2.msra.mxu0 0.0
        %370 = vmatprep.subr.mxu0 0.0
        %371 = vmatpush2.msra.mxu0 0.0
        %372 = vmatprep.subr.mxu0 0.0
        %373 = vmatpush2.msra.mxu0 0.0
        %374 = vmatprep.subr.mxu0 0.0
        %375 = vmatpush2.msra.mxu0 0.0
        %376 = vmatprep.subr.mxu0 0.0
        %377 = vmatpush2.msra.mxu0 0.0
        %378 = vmatprep.subr.mxu0 0.0
        %379 = vmatpush2.msra.mxu0 0.0
        %380 = vmatprep.subr.mxu0 0.0
        %381 = vmatpush2.msra.mxu0 0.0
        %382 = vmatprep.subr.mxu0 0.0
        %383 = vmatpush2.msra.mxu0 0.0
        %384 = vmatprep.subr.mxu0 0.0
        %385 = vmatpush2.msra.mxu0 0.0
        %386 = vmatprep.mubr.f32.mxu0 0.0
        %387 = vmatmul.mubr.f32.gmra.mxu0 %v320
        %v388 = vpop.f32.mrf.mxu0
        %v389 = vadd.f32 0.0, %v388
        %v390 = vpop.f32.mrf.mxu0
        %391 = vdwg.mxu0
        %v393 = vsel %vm318, %v279, 0
        %395 = vmatprep.subr.mxu0 0.0
        %396 = vmatpush1.msra.mxu0 0.0
        %397 = vmatprep.subr.mxu0 0.0
        %398 = vmatpush1.msra.mxu0 0.0
        %399 = vmatprep.subr.mxu0 0.0
        %400 = vmatpush1.msra.mxu0 0.0
        %401 = vmatprep.subr.mxu0 0.0
        %402 = vmatpush1.msra.mxu0 0.0
        %403 = vmatprep.subr.mxu0 0.0
        %404 = vmatpush1.msra.mxu0 0.0
        %405 = vmatprep.subr.mxu0 0.0
        %406 = vmatpush1.msra.mxu0 0.0
        %407 = vmatprep.subr.mxu0 0.0
        %408 = vmatpush1.msra.mxu0 0.0
        %409 = vmatprep.subr.mxu0 0.0
        %410 = vmatpush1.msra.mxu0 0.0
        %411 = vmatprep.subr.mxu0 0.0
        %412 = vmatpush1.msra.mxu0 0.0
        %413 = vmatprep.subr.mxu0 0.0
        %414 = vmatpush1.msra.mxu0 0.0
        %415 = vmatprep.subr.mxu0 0.0
        %416 = vmatpush1.msra.mxu0 0.0
        %417 = vmatprep.subr.mxu0 0.0
        %418 = vmatpush1.msra.mxu0 0.0
        %419 = vmatprep.subr.mxu0 0.0
        %420 = vmatpush1.msra.mxu0 0.0
        %421 = vmatprep.subr.mxu0 0.0
        %422 = vmatpush1.msra.mxu0 0.0
        %423 = vmatprep.subr.mxu0 0.0
        %424 = vmatpush1.msra.mxu0 0.0
        %425 = vmatprep.subr.mxu0 0.0
        %426 = vmatpush1.msra.mxu0 %v313
        %427 = vmatprep.subr.mxu0 0.0
        %428 = vmatpush2.msra.mxu0 0.0
        %429 = vmatprep.subr.mxu0 0.0
        %430 = vmatpush2.msra.mxu0 0.0
        %431 = vmatprep.subr.mxu0 0.0
        %432 = vmatpush2.msra.mxu0 0.0
        %433 = vmatprep.subr.mxu0 0.0
        %434 = vmatpush2.msra.mxu0 0.0
        %435 = vmatprep.subr.mxu0 0.0
        %436 = vmatpush2.msra.mxu0 0.0
        %437 = vmatprep.subr.mxu0 0.0
        %438 = vmatpush2.msra.mxu0 0.0
        %439 = vmatprep.subr.mxu0 0.0
        %440 = vmatpush2.msra.mxu0 0.0
        %441 = vmatprep.subr.mxu0 0.0
        %442 = vmatpush2.msra.mxu0 0.0
        %443 = vmatprep.subr.mxu0 0.0
        %444 = vmatpush2.msra.mxu0 0.0
        %445 = vmatprep.subr.mxu0 0.0
        %446 = vmatpush2.msra.mxu0 0.0
        %447 = vmatprep.subr.mxu0 0.0
        %448 = vmatpush2.msra.mxu0 0.0
        %449 = vmatprep.subr.mxu0 0.0
        %450 = vmatpush2.msra.mxu0 0.0
        %451 = vmatprep.subr.mxu0 0.0
        %452 = vmatpush2.msra.mxu0 0.0
        %453 = vmatprep.subr.mxu0 0.0
        %454 = vmatpush2.msra.mxu0 0.0
        %455 = vmatprep.subr.mxu0 0.0
        %456 = vmatpush2.msra.mxu0 0.0
        %457 = vmatprep.subr.mxu0 0.0
        %458 = vmatpush2.msra.mxu0 0.0
        %459 = vmatprep.mubr.f32.mxu0 0.0
        %460 = vmatmul.mubr.f32.gmra.mxu0 %v393
        %v461 = vpop.f32.mrf.mxu0
        %v462 = vadd.f32 %v389, %v461
        %v463 = vpop.f32.mrf.mxu0
        %464 = vdwg.mxu0
        %465 = vrot.lane.b32.xlu0 %v313, 126
        %v466 = vpop.permute.xlu0 %465
        %v469 = vsel %vm318, %v281, 0
        %471 = vmatprep.subr.mxu0 0.0
        %472 = vmatpush1.msra.mxu0 0.0
        %473 = vmatprep.subr.mxu0 0.0
        %474 = vmatpush1.msra.mxu0 0.0
        %475 = vmatprep.subr.mxu0 0.0
        %476 = vmatpush1.msra.mxu0 0.0
        %477 = vmatprep.subr.mxu0 0.0
        %478 = vmatpush1.msra.mxu0 0.0
        %479 = vmatprep.subr.mxu0 0.0
        %480 = vmatpush1.msra.mxu0 0.0
        %481 = vmatprep.subr.mxu0 0.0
        %482 = vmatpush1.msra.mxu0 0.0
        %483 = vmatprep.subr.mxu0 0.0
        %484 = vmatpush1.msra.mxu0 0.0
        %485 = vmatprep.subr.mxu0 0.0
        %486 = vmatpush1.msra.mxu0 0.0
        %487 = vmatprep.subr.mxu0 0.0
        %488 = vmatpush1.msra.mxu0 0.0
        %489 = vmatprep.subr.mxu0 0.0
        %490 = vmatpush1.msra.mxu0 0.0
        %491 = vmatprep.subr.mxu0 0.0
        %492 = vmatpush1.msra.mxu0 0.0
        %493 = vmatprep.subr.mxu0 0.0
        %494 = vmatpush1.msra.mxu0 0.0
        %495 = vmatprep.subr.mxu0 0.0
        %496 = vmatpush1.msra.mxu0 0.0
        %497 = vmatprep.subr.mxu0 0.0
        %498 = vmatpush1.msra.mxu0 0.0
        %499 = vmatprep.subr.mxu0 0.0
        %500 = vmatpush1.msra.mxu0 0.0
        %501 = vmatprep.subr.mxu0 0.0
        %502 = vmatpush1.msra.mxu0 %v466
        %503 = vmatprep.subr.mxu0 0.0
        %504 = vmatpush2.msra.mxu0 0.0
        %505 = vmatprep.subr.mxu0 0.0
        %506 = vmatpush2.msra.mxu0 0.0
        %507 = vmatprep.subr.mxu0 0.0
        %508 = vmatpush2.msra.mxu0 0.0
        %509 = vmatprep.subr.mxu0 0.0
        %510 = vmatpush2.msra.mxu0 0.0
        %511 = vmatprep.subr.mxu0 0.0
        %512 = vmatpush2.msra.mxu0 0.0
        %513 = vmatprep.subr.mxu0 0.0
        %514 = vmatpush2.msra.mxu0 0.0
        %515 = vmatprep.subr.mxu0 0.0
        %516 = vmatpush2.msra.mxu0 0.0
        %517 = vmatprep.subr.mxu0 0.0
        %518 = vmatpush2.msra.mxu0 0.0
        %519 = vmatprep.subr.mxu0 0.0
        %520 = vmatpush2.msra.mxu0 0.0
        %521 = vmatprep.subr.mxu0 0.0
        %522 = vmatpush2.msra.mxu0 0.0
        %523 = vmatprep.subr.mxu0 0.0
        %524 = vmatpush2.msra.mxu0 0.0
        %525 = vmatprep.subr.mxu0 0.0
        %526 = vmatpush2.msra.mxu0 0.0
        %527 = vmatprep.subr.mxu0 0.0
        %528 = vmatpush2.msra.mxu0 0.0
        %529 = vmatprep.subr.mxu0 0.0
        %530 = vmatpush2.msra.mxu0 0.0
        %531 = vmatprep.subr.mxu0 0.0
        %532 = vmatpush2.msra.mxu0 0.0
        %533 = vmatprep.subr.mxu0 0.0
        %534 = vmatpush2.msra.mxu0 0.0
        %535 = vmatprep.mubr.f32.mxu0 0.0
        %536 = vmatmul.mubr.f32.gmra.mxu0 %v469
        %v537 = vpop.f32.mrf.mxu0
        %v538 = vadd.f32 0.0, %v537
        %v539 = vpop.f32.mrf.mxu0
        %540 = vdwg.mxu0
        %v541 = vadd.f32 %v462, %v538
        %542 = vrot.lane.b32.xlu0 %v313, 125
        %v543 = vpop.permute.xlu0 %542
        %v546 = vsel %vm318, %v282, 0
        %548 = vmatprep.subr.mxu0 0.0
        %549 = vmatpush1.msra.mxu0 0.0
        %550 = vmatprep.subr.mxu0 0.0
        %551 = vmatpush1.msra.mxu0 0.0
        %552 = vmatprep.subr.mxu0 0.0
        %553 = vmatpush1.msra.mxu0 0.0
        %554 = vmatprep.subr.mxu0 0.0
        %555 = vmatpush1.msra.mxu0 0.0
        %556 = vmatprep.subr.mxu0 0.0
        %557 = vmatpush1.msra.mxu0 0.0
        %558 = vmatprep.subr.mxu0 0.0
        %559 = vmatpush1.msra.mxu0 0.0
        %560 = vmatprep.subr.mxu0 0.0
        %561 = vmatpush1.msra.mxu0 0.0
        %562 = vmatprep.subr.mxu0 0.0
        %563 = vmatpush1.msra.mxu0 0.0
        %564 = vmatprep.subr.mxu0 0.0
        %565 = vmatpush1.msra.mxu0 0.0
        %566 = vmatprep.subr.mxu0 0.0
        %567 = vmatpush1.msra.mxu0 0.0
        %568 = vmatprep.subr.mxu0 0.0
        %569 = vmatpush1.msra.mxu0 0.0
        %570 = vmatprep.subr.mxu0 0.0
        %571 = vmatpush1.msra.mxu0 0.0
        %572 = vmatprep.subr.mxu0 0.0
        %573 = vmatpush1.msra.mxu0 0.0
        %574 = vmatprep.subr.mxu0 0.0
        %575 = vmatpush1.msra.mxu0 0.0
        %576 = vmatprep.subr.mxu0 0.0
        %577 = vmatpush1.msra.mxu0 0.0
        %578 = vmatprep.subr.mxu0 0.0
        %579 = vmatpush1.msra.mxu0 %v543
        %580 = vmatprep.subr.mxu0 0.0
        %581 = vmatpush2.msra.mxu0 0.0
        %582 = vmatprep.subr.mxu0 0.0
        %583 = vmatpush2.msra.mxu0 0.0
        %584 = vmatprep.subr.mxu0 0.0
        %585 = vmatpush2.msra.mxu0 0.0
        %586 = vmatprep.subr.mxu0 0.0
        %587 = vmatpush2.msra.mxu0 0.0
        %588 = vmatprep.subr.mxu0 0.0
        %589 = vmatpush2.msra.mxu0 0.0
        %590 = vmatprep.subr.mxu0 0.0
        %591 = vmatpush2.msra.mxu0 0.0
        %592 = vmatprep.subr.mxu0 0.0
        %593 = vmatpush2.msra.mxu0 0.0
        %594 = vmatprep.subr.mxu0 0.0
        %595 = vmatpush2.msra.mxu0 0.0
        %596 = vmatprep.subr.mxu0 0.0
        %597 = vmatpush2.msra.mxu0 0.0
        %598 = vmatprep.subr.mxu0 0.0
        %599 = vmatpush2.msra.mxu0 0.0
        %600 = vmatprep.subr.mxu0 0.0
        %601 = vmatpush2.msra.mxu0 0.0
        %602 = vmatprep.subr.mxu0 0.0
        %603 = vmatpush2.msra.mxu0 0.0
        %604 = vmatprep.subr.mxu0 0.0
        %605 = vmatpush2.msra.mxu0 0.0
        %606 = vmatprep.subr.mxu0 0.0
        %607 = vmatpush2.msra.mxu0 0.0
        %608 = vmatprep.subr.mxu0 0.0
        %609 = vmatpush2.msra.mxu0 0.0
        %610 = vmatprep.subr.mxu0 0.0
        %611 = vmatpush2.msra.mxu0 0.0
        %612 = vmatprep.mubr.f32.mxu0 0.0
        %613 = vmatmul.mubr.f32.gmra.mxu0 %v546
        %v614 = vpop.f32.mrf.mxu0
        %v615 = vadd.f32 0.0, %v614
        %v616 = vpop.f32.mrf.mxu0
        %617 = vdwg.mxu0
        %v618 = vadd.f32 %v541, %v615
        %619 = vrot.lane.b32.xlu0 %v313, 124
        %v620 = vpop.permute.xlu0 %619
        %v623 = vsel %vm318, %v283, 0
        %625 = vmatprep.subr.mxu0 0.0
        %626 = vmatpush1.msra.mxu0 0.0
        %627 = vmatprep.subr.mxu0 0.0
        %628 = vmatpush1.msra.mxu0 0.0
        %629 = vmatprep.subr.mxu0 0.0
        %630 = vmatpush1.msra.mxu0 0.0
        %631 = vmatprep.subr.mxu0 0.0
        %632 = vmatpush1.msra.mxu0 0.0
        %633 = vmatprep.subr.mxu0 0.0
        %634 = vmatpush1.msra.mxu0 0.0
        %635 = vmatprep.subr.mxu0 0.0
        %636 = vmatpush1.msra.mxu0 0.0
        %637 = vmatprep.subr.mxu0 0.0
        %638 = vmatpush1.msra.mxu0 0.0
        %639 = vmatprep.subr.mxu0 0.0
        %640 = vmatpush1.msra.mxu0 0.0
        %641 = vmatprep.subr.mxu0 0.0
        %642 = vmatpush1.msra.mxu0 0.0
        %643 = vmatprep.subr.mxu0 0.0
        %644 = vmatpush1.msra.mxu0 0.0
        %645 = vmatprep.subr.mxu0 0.0
        %646 = vmatpush1.msra.mxu0 0.0
        %647 = vmatprep.subr.mxu0 0.0
        %648 = vmatpush1.msra.mxu0 0.0
        %649 = vmatprep.subr.mxu0 0.0
        %650 = vmatpush1.msra.mxu0 0.0
        %651 = vmatprep.subr.mxu0 0.0
        %652 = vmatpush1.msra.mxu0 0.0
        %653 = vmatprep.subr.mxu0 0.0
        %654 = vmatpush1.msra.mxu0 0.0
        %655 = vmatprep.subr.mxu0 0.0
        %656 = vmatpush1.msra.mxu0 %v620
        %657 = vmatprep.subr.mxu0 0.0
        %658 = vmatpush2.msra.mxu0 0.0
        %659 = vmatprep.subr.mxu0 0.0
        %660 = vmatpush2.msra.mxu0 0.0
        %661 = vmatprep.subr.mxu0 0.0
        %662 = vmatpush2.msra.mxu0 0.0
        %663 = vmatprep.subr.mxu0 0.0
        %664 = vmatpush2.msra.mxu0 0.0
        %665 = vmatprep.subr.mxu0 0.0
        %666 = vmatpush2.msra.mxu0 0.0
        %667 = vmatprep.subr.mxu0 0.0
        %668 = vmatpush2.msra.mxu0 0.0
        %669 = vmatprep.subr.mxu0 0.0
        %670 = vmatpush2.msra.mxu0 0.0
        %671 = vmatprep.subr.mxu0 0.0
        %672 = vmatpush2.msra.mxu0 0.0
        %673 = vmatprep.subr.mxu0 0.0
        %674 = vmatpush2.msra.mxu0 0.0
        %675 = vmatprep.subr.mxu0 0.0
        %676 = vmatpush2.msra.mxu0 0.0
        %677 = vmatprep.subr.mxu0 0.0
        %678 = vmatpush2.msra.mxu0 0.0
        %679 = vmatprep.subr.mxu0 0.0
        %680 = vmatpush2.msra.mxu0 0.0
        %681 = vmatprep.subr.mxu0 0.0
        %682 = vmatpush2.msra.mxu0 0.0
        %683 = vmatprep.subr.mxu0 0.0
        %684 = vmatpush2.msra.mxu0 0.0
        %685 = vmatprep.subr.mxu0 0.0
        %686 = vmatpush2.msra.mxu0 0.0
        %687 = vmatprep.subr.mxu0 0.0
        %688 = vmatpush2.msra.mxu0 0.0
        %689 = vmatprep.mubr.f32.mxu0 0.0
        %690 = vmatmul.mubr.f32.gmra.mxu0 %v623
        %v691 = vpop.f32.mrf.mxu0
        %v692 = vadd.f32 0.0, %v691
        %v693 = vpop.f32.mrf.mxu0
        %694 = vdwg.mxu0
        %v695 = vadd.f32 %v618, %v692
        %697 = vset.pattern.permute.xlu0 0
        %698 = vperm.xlu0 %697, %v278
        %v699 = vpop.permute.xlu0 %698
        %v701 = vadd.f32 %v695, %v699
        %vm702 = vcmask 261120
        %703 = vst.msk [vmem:[%s268] sm:$0xff] %vm702, %v701
        %s704 = sand.u32 %s165, 1
        %s705 = scalar_lea.sflag [#allocation4], %s704
        %s706 = sand.u32 %s165, 1
        %s707 = smul.addr %s706, 8
        %s708 = scalar_lea.vmem [#allocation5], %s707
        // Predicated region
        $region49: #{tpu_custom_call.1} parent=43 // pred_check
          %p709 = pneg %p175
        $region50: #{tpu_custom_call.1} parent=43 // pred_check_branch
          %711 = sbr.rel (%p709) target = $region52
        $region51: #{tpu_custom_call.1} parent=43 // pred_region
          %s713 = ssub.s32 128, 128
          %714 = vsyncadd %s705, %s713
          %s715 = smul.addr %s21, 128
          %s716 = scalar_lea.hbm %s6, %s715
          %s718 = sshll.u32 %s708, 4
          %s719 = int_to_ptr.vmem [resolvable:$true] %s718
          %721 = dma.vmem_to_hbm [thread:$0]  %s719, 128, %s716, %s705
        $region52: #{tpu_custom_call.1} parent=43 // pred_fallthru
          _
      $region44: #{tpu_custom_call.1} parent=5 // pred_fallthru
        _
      %p722 = scmp.le.s32.totalorder 2, %s16
      // Predicated region
      $region53: #{tpu_custom_call.1} parent=5 // pred_check
        %p723 = pneg %p722
      $region54: #{tpu_custom_call.1} parent=5 // pred_check_branch
        %725 = sbr.rel (%p723) target = $region56
      $region55: #{tpu_custom_call.1} parent=5 // pred_region
        %s726 = ssub.s32 %s16, 2
        // Predicated region
        $region57: #{tpu_custom_call.1} parent=55 // pred_check
          %p727 = pneg %p181
        $region58: #{tpu_custom_call.1} parent=55 // pred_check_branch
          %729 = sbr.rel (%p727) target = $region60
        $region59: #{tpu_custom_call.1} parent=55 // pred_region
          %s730 = sand.u32 %s166, 1
          %s731 = scalar_lea.sflag [#allocation4], %s730
          %s732 = sand.u32 %s166, 1
          %s733 = smul.addr %s732, 8
          %s734 = scalar_lea.vmem [#allocation5], %s733
          %735 = dma.done %s731, 128
        $region60: #{tpu_custom_call.1} parent=55 // pred_fallthru
          _
      $region56: #{tpu_custom_call.1} parent=5 // pred_fallthru
        _
    $region6: #{tpu_custom_call.1} parent=1 // loop_footer
      %s20 = sadd.s32 1, %s16
    $region7: #{tpu_custom_call.1} parent=1 // loop_footer_branch
      %15 = sbr.rel target = $region3
    $region8: #{tpu_custom_call.1} parent=1 // loop_exit
      _
    %736 = vsyncpa [#allocation3], 1
    %s737 = scalar_lea.sflag [#allocation3], 1
    %738 = vsyncpa %s737, 1
    %739 = vsyncpa [#allocation4], 1
    %s740 = scalar_lea.sflag [#allocation4], 1
    %741 = vsyncpa %s740, 1

</llo_original>
